<compile_context>
chip_gen: v7x
topology: tpu7x:2x2x1
jax: 0.10.0
libtpu: 0.0.40
codegen_flags: <defaults>
</compile_context>

<pallas_src>
import math
from functools import partial

import jax
import jax.numpy as jnp
from jax.experimental import pallas as pl
from jax.experimental.pallas import tpu as pltpu


def _round_up(x, m):
    return ((x + m - 1) // m) * m


def _num_tensorcores():
    """2 on v7x (two TensorCores per chip share the grid), else 1."""
    try:
        kind = jax.devices()[0].device_kind.lower()
        if "v7" in kind or "7x" in kind:
            return 2
    except Exception:
        pass
    return 1


def _mlp_kernel(x_ref, w1_ref, b1_ref, w2_ref, b2_ref, o_ref):
    # Cast the activation tile to bf16 in-kernel (no wrapper pad/cast pass);
    # MXU runs bf16 x bf16 with f32 accumulation.
    x = x_ref[...].astype(jnp.bfloat16)
    h = jnp.dot(x, w1_ref[...], preferred_element_type=jnp.float32)
    h = h + b1_ref[...]                                   # f32 bias, broadcast [1, H]

    # Exact GELU (erf formulation; matches PyTorch nn.GELU() default).
    inv_sqrt2 = jnp.float32(1.0 / math.sqrt(2.0))
    h = 0.5 * h * (1.0 + jax.lax.erf(h * inv_sqrt2))

    # Dropout(p=0.2): identity in eval/inference mode.
    # TODO(synk): training-mode dropout (pltpu.prng_seed/prng_random_bits mask
    #             with 1/(1-p) scaling) not emitted.

    # Second linear: bf16 activation x bf16 lane-padded weights, f32 accumulate.
    o = jnp.dot(h.astype(jnp.bfloat16), w2_ref[...],
                preferred_element_type=jnp.float32)
    o = o + b2_ref[...]                                   # f32 bias, broadcast [1, n_pad]
    o_ref[...] = o.astype(o_ref.dtype)


def prepare_params(w1, b1, w2, b2, *, weight_dtype=jnp.bfloat16):
    """One-time parameter prep (call once, reuse across forward calls).

    Returns (w1_p, b1_p, w2_p, b2_p):
      * W1/W2 cast to bf16 (half the weight DMA that dominates at small batch).
      * W2/b2 zero-padded along the class dim to a multiple of 128 so the
        second matmul pops a full MXU tile and output stores are lane-dense.
      * Biases kept f32, reshaped to [1, N] for in-kernel broadcast.
    """
    D, H = w1.shape
    n_classes = w2.shape[1]
    n_pad = _round_up(n_classes, 128)
    w1_p = w1.astype(weight_dtype)
    b1_p = b1.reshape(1, H).astype(jnp.float32)
    w2_p = jnp.zeros((H, n_pad), weight_dtype).at[:, :n_classes].set(
        w2.astype(weight_dtype))
    b2_p = jnp.zeros((1, n_pad), jnp.float32).at[:, :n_classes].set(
        b2.astype(jnp.float32))
    return w1_p, b1_p, w2_p, b2_p


def classifier_forward(x, w1_p, b1_p, w2_p, b2_p, *, n_classes,
                       batch_tile=512, out_dtype=jnp.float32):
    """x: [B, input_size] f32 -> [B, n_classes] (x.dtype).

    Params must come from `prepare_params` (bf16, lane-padded).
    """
    B, D = x.shape
    H = w1_p.shape[1]
    n_pad = w2_p.shape[1]

    # Batch tile: multiple of 8 (sublane), capped at `batch_tile`.  On v7x the
    # batch is split into >= 2 grid steps so the "parallel" axis shards across
    # both TensorCores; on v5e/v6e keep one larger tile (single TC).
    num_tc = _num_tensorcores()
    tb = min(batch_tile, _round_up(max(1, -(-B // num_tc)), 8))
    b_pad = _round_up(B, tb)

    # Only pad x when the batch does not divide the tile (usually a no-op).
    x_in = x if b_pad == B else jnp.zeros((b_pad, D), x.dtype).at[:B].set(x)

    grid = (b_pad // tb,)

    # Explicit VMEM budget: double-buffered x/out tiles + resident weights
    # (still double-buffered by the pipeline) + f32 intermediate headroom.
    # TODO(synk): at production hidden sizes, single-buffer the constant-index
    #             weight specs (pipeline_mode=pl.Buffered(1)) to halve resident
    #             weight VMEM on v7x's 64 MiB.
    est = (2 * (tb * D * jnp.dtype(x.dtype).itemsize
                + tb * n_pad * jnp.dtype(out_dtype).itemsize
                + w1_p.size * jnp.dtype(w1_p.dtype).itemsize
                + w2_p.size * jnp.dtype(w2_p.dtype).itemsize
                + (b1_p.size + b2_p.size) * 4)
           + 4 * tb * (H + n_pad))
    vmem_limit = int(min(64 << 20, max(2 * est, 16 << 20)))

    out = pl.pallas_call(
        _mlp_kernel,
        out_shape=jax.ShapeDtypeStruct((b_pad, n_pad), out_dtype),
        grid_spec=pltpu.PrefetchScalarGridSpec(
            num_scalar_prefetch=0,
            grid=grid,
            in_specs=[
                pl.BlockSpec((tb, D), lambda i: (i, 0)),     # x: tiled over batch
                pl.BlockSpec((D, H), lambda i: (0, 0)),      # W1: resident
                pl.BlockSpec((1, H), lambda i: (0, 0)),      # b1: resident
                pl.BlockSpec((H, n_pad), lambda i: (0, 0)),  # W2 (lane-padded): resident
                pl.BlockSpec((1, n_pad), lambda i: (0, 0)),  # b2 (lane-padded): resident
            ],
            out_specs=pl.BlockSpec((tb, n_pad), lambda i: (i, 0)),
        ),
        compiler_params=pltpu.CompilerParams(
            dimension_semantics=("parallel",),
            vmem_limit_bytes=vmem_limit,
        ),
    )(x_in, w1_p, b1_p, w2_p, b2_p)

    return out[:B, :n_classes].astype(x.dtype)


def init_params(key, input_size, hidden_size, n_classes, dtype=jnp.float32):
    """Deterministic init matching nn.Linear's default (uniform +/- 1/sqrt(fan_in)).

    Weights are stored transposed relative to PyTorch ([in, out]) so the kernel
    computes x @ W directly.
    """
    k1, k2, k3, k4 = jax.random.split(key, 4)
    bound1 = 1.0 / math.sqrt(input_size)
    bound2 = 1.0 / math.sqrt(hidden_size)
    w1 = jax.random.uniform(k1, (input_size, hidden_size), dtype,
                            minval=-bound1, maxval=bound1)
    b1 = jax.random.uniform(k2, (hidden_size,), dtype,
                            minval=-bound1, maxval=bound1)
    w2 = jax.random.uniform(k3, (hidden_size, n_classes), dtype,
                            minval=-bound2, maxval=bound2)
    b2 = jax.random.uniform(k4, (n_classes,), dtype,
                            minval=-bound2, maxval=bound2)
    return w1, b1, w2, b2


if __name__ == "__main__":
    # Small shapes consistent with the module's forward (Linear -> GELU -> Linear).
    batch = 16
    input_size = 256     # module default is 1024; scaled down
    hidden_size = 128    # module default is 512; scaled down
    n_classes = 2

    key = jax.random.PRNGKey(0)
    kx, kp = jax.random.split(key)
    x = jax.random.normal(kx, (batch, input_size), jnp.float32)
    w1, b1, w2, b2 = init_params(kp, input_size, hidden_size, n_classes)

    # One-time parameter prep (hoisted out of the per-call forward path).
    params = prepare_params(w1, b1, w2, b2)
    params = jax.block_until_ready(params)

    fwd = jax.jit(partial(classifier_forward, n_classes=n_classes))
    out = fwd(x, *params)
    out = jax.block_until_ready(out)
    assert out.shape == (batch, n_classes)

    # Reference 1: same numeric path (bf16 matmul operands, f32 accumulation,
    # f32 bias + exact-erf GELU) -> tight tolerance.
    xb = x.astype(jnp.bfloat16)
    h_ref = jnp.dot(xb, w1.astype(jnp.bfloat16),
                    preferred_element_type=jnp.float32) + b1
    h_ref = 0.5 * h_ref * (1.0 + jax.lax.erf(h_ref / jnp.float32(math.sqrt(2.0))))
    ref_bf16 = jnp.dot(h_ref.astype(jnp.bfloat16), w2.astype(jnp.bfloat16),
                       preferred_element_type=jnp.float32) + b2
    assert jnp.allclose(out, ref_bf16, atol=5e-3, rtol=5e-3), \
        "mismatch vs matched-precision reference"

    # Reference 2: full f32 path (PyTorch-equivalent numerics) -> loose
    # tolerance documents the bf16 operand-cast deviation.
    h32 = jnp.dot(x, w1) + b1
    h32 = 0.5 * h32 * (1.0 + jax.lax.erf(h32 / jnp.float32(math.sqrt(2.0))))
    ref_f32 = jnp.dot(h32, w2) + b2
    assert jnp.allclose(out, ref_f32, atol=5e-2, rtol=5e-2), \
        "mismatch vs f32 reference beyond expected bf16 error"

    print("KERNEL_OK")
</pallas_src>

<mosaic_0001>
module attributes {stable_mosaic.version = 11 : i64} {
  func.func @_mlp_kernel(%arg0: i32, %arg1: memref<16x256xf32, #tpu.memory_space<vmem>>, %arg2: memref<256x128xbf16, #tpu.memory_space<vmem>>, %arg3: memref<1x128xf32, #tpu.memory_space<vmem>>, %arg4: memref<128x128xbf16, #tpu.memory_space<vmem>>, %arg5: memref<1x128xf32, #tpu.memory_space<vmem>>, %arg6: memref<16x128xf32, #tpu.memory_space<vmem>>) attributes {dimension_semantics = [#tpu.dimension_semantics<parallel>], iteration_bounds = array<i64: 1>, scalar_prefetch = 0 : i64, scratch_operands = 0 : i64, tpu.core_type = #tpu.core_type<tc>, window_params = [{transform_indices = @transform_0, window_bounds = array<i64: 16, 256>}, {pipeline_mode = #tpu.pipeline_mode<synchronous>, transform_indices = @transform_1, window_bounds = array<i64: 256, 128>}, {pipeline_mode = #tpu.pipeline_mode<synchronous>, transform_indices = @transform_2, window_bounds = array<i64: 1, 128>}, {pipeline_mode = #tpu.pipeline_mode<synchronous>, transform_indices = @transform_3, window_bounds = array<i64: 128, 128>}, {pipeline_mode = #tpu.pipeline_mode<synchronous>, transform_indices = @transform_4, window_bounds = array<i64: 1, 128>}, {transform_indices = @transform_5, window_bounds = array<i64: 16, 128>}]} {
    %c0 = arith.constant 0 : index
    %c0_0 = arith.constant 0 : index
    %0 = vector.load %arg1[%c0, %c0_0] : memref<16x256xf32, #tpu.memory_space<vmem>>, vector<16x256xf32>
    %1 = arith.truncf %0 : vector<16x256xf32> to vector<16x256xbf16>
    %c0_1 = arith.constant 0 : index
    %c0_2 = arith.constant 0 : index
    %2 = vector.load %arg2[%c0_1, %c0_2] : memref<256x128xbf16, #tpu.memory_space<vmem>>, vector<256x128xbf16>
    %cst = arith.constant dense<0.000000e+00> : vector<16x128xf32>
    %3 = tpu.matmul %1, %2, %cst {dimension_numbers = #tpu.dot_dimension_numbers<[1], [0], [0], [1], [0, 0, 1, 1], [], []>} : vector<16x256xbf16>, vector<256x128xbf16>, vector<16x128xf32> -> vector<16x128xf32>
    %c0_3 = arith.constant 0 : index
    %c0_4 = arith.constant 0 : index
    %4 = vector.load %arg3[%c0_3, %c0_4] : memref<1x128xf32, #tpu.memory_space<vmem>>, vector<1x128xf32>
    %5 = vector.broadcast %4 : vector<1x128xf32> to vector<16x128xf32>
    %6 = arith.addf %3, %5 : vector<16x128xf32>
    %cst_5 = arith.constant 5.000000e-01 : f32
    %7 = vector.broadcast %cst_5 : f32 to vector<16x128xf32>
    %8 = arith.mulf %7, %6 : vector<16x128xf32>
    %cst_6 = arith.constant 0.707106769 : f32
    %9 = vector.broadcast %cst_6 : f32 to vector<16x128xf32>
    %10 = arith.mulf %6, %9 : vector<16x128xf32>
    %11 = math.erf %10 : vector<16x128xf32>
    %cst_7 = arith.constant 1.000000e+00 : f32
    %12 = vector.broadcast %cst_7 : f32 to vector<16x128xf32>
    %13 = arith.addf %12, %11 : vector<16x128xf32>
    %14 = arith.mulf %8, %13 : vector<16x128xf32>
    %15 = arith.truncf %14 : vector<16x128xf32> to vector<16x128xbf16>
    %c0_8 = arith.constant 0 : index
    %c0_9 = arith.constant 0 : index
    %16 = vector.load %arg4[%c0_8, %c0_9] : memref<128x128xbf16, #tpu.memory_space<vmem>>, vector<128x128xbf16>
    %cst_10 = arith.constant dense<0.000000e+00> : vector<16x128xf32>
    %17 = tpu.matmul %15, %16, %cst_10 {dimension_numbers = #tpu.dot_dimension_numbers<[1], [0], [0], [1], [0, 0, 1, 1], [], []>} : vector<16x128xbf16>, vector<128x128xbf16>, vector<16x128xf32> -> vector<16x128xf32>
    %c0_11 = arith.constant 0 : index
    %c0_12 = arith.constant 0 : index
    %18 = vector.load %arg5[%c0_11, %c0_12] : memref<1x128xf32, #tpu.memory_space<vmem>>, vector<1x128xf32>
    %19 = vector.broadcast %18 : vector<1x128xf32> to vector<16x128xf32>
    %20 = arith.addf %17, %19 : vector<16x128xf32>
    %c0_13 = arith.constant 0 : index
    %c0_14 = arith.constant 0 : index
    %21 = vector.load %arg6[%c0_13, %c0_14] : memref<16x128xf32, #tpu.memory_space<vmem>>, vector<16x128xf32>
    tpu.vector_store %arg6[%c0_13, %c0_14], %20 {strides = array<i32>} : memref<16x128xf32, #tpu.memory_space<vmem>>, vector<16x128xf32>,
    return
  }
  func.func @transform_0(%arg0: i32) -> (i32, i32) {
    %c0_i32 = arith.constant 0 : i32
    %c0_i32_0 = arith.constant 0 : i32
    return %arg0, %c0_i32 : i32, i32
  }
  func.func @transform_1(%arg0: i32) -> (i32, i32) {
    %c0_i32 = arith.constant 0 : i32
    %c0_i32_0 = arith.constant 0 : i32
    %c0_i32_1 = arith.constant 0 : i32
    return %c0_i32, %c0_i32_0 : i32, i32
  }
  func.func @transform_2(%arg0: i32) -> (i32, i32) {
    %c0_i32 = arith.constant 0 : i32
    %c0_i32_0 = arith.constant 0 : i32
    %c0_i32_1 = arith.constant 0 : i32
    return %c0_i32, %c0_i32_0 : i32, i32
  }
  func.func @transform_3(%arg0: i32) -> (i32, i32) {
    %c0_i32 = arith.constant 0 : i32
    %c0_i32_0 = arith.constant 0 : i32
    %c0_i32_1 = arith.constant 0 : i32
    return %c0_i32, %c0_i32_0 : i32, i32
  }
  func.func @transform_4(%arg0: i32) -> (i32, i32) {
    %c0_i32 = arith.constant 0 : i32
    %c0_i32_0 = arith.constant 0 : i32
    %c0_i32_1 = arith.constant 0 : i32
    return %c0_i32, %c0_i32_0 : i32, i32
  }
  func.func @transform_5(%arg0: i32) -> (i32, i32) {
    %c0_i32 = arith.constant 0 : i32
    %c0_i32_0 = arith.constant 0 : i32
    return %arg0, %c0_i32 : i32, i32
  }
}

</mosaic_0001>

<llo_original>
// kernel: classifier_forward.1
$region0: #{classifier_forward.1}
  #allocation0 [shape = 'u32[]', space=smem, size = 0x4, offset = 0x4, fixed_abs, tag = 'smem constant byte address 0x4 - core index']
  #allocation1 [shape = 'u32[144,128]{1,0:T(1,128)}', space=vmem, size = 0x12000, scoped, tag = 'internal scratch']
  %s0 = inlined_call_operand.hbm [shape: f32[16,256], index: 0, kind: input, shape index: {}]
  %s1 = inlined_call_operand.hbm [shape: bf16[256,128], index: 1, kind: input, shape index: {}]
  %s2 = inlined_call_operand.vmem [shape: f32[1,128], index: 2, kind: input, shape index: {}]
  %s3 = inlined_call_operand.hbm [shape: bf16[128,128], index: 3, kind: input, shape index: {}]
  %s4 = inlined_call_operand.vmem [shape: f32[1,128], index: 4, kind: input, shape index: {}]
  %s5 = inlined_call_operand.vmem [shape: f32[16,128], index: 5, kind: output, shape index: {}]
  %s6 = sld [smem:[#allocation0]]
  $region42: #{classifier_forward.1} parent=0
    _
  %s8 = ssub.s32 1, %s6
  %s9 = scalar_select 0, %s8, %s6
  $region1: #{classifier_forward.1} parent=0
    #allocation2 [shape = 'u8[16384]{0}', space=vmem, size = 0x4000, scoped, tag = 'input window, operand 0, single buffered']
    #allocation3 [shape = 's32[1]{0}', space=sflag, size = 0x4, scoped, tag = 'scoped memory for classifier_forward.1']
    #allocation4 [shape = 'u8[65536]{0}', space=vmem, size = 0x10000, scoped, tag = 'input window, operand 1, single buffered']
    #allocation5 [shape = 's32[1]{0}', space=sflag, size = 0x4, scoped, tag = 'scoped memory for classifier_forward.1']
    #allocation6 [shape = 'u8[32768]{0}', space=vmem, size = 0x8000, scoped, tag = 'input window, operand 3, single buffered']
    %10 = vsyncpa [#allocation3], 0
    %11 = vsyncpa [#allocation5], 0
    // Predicated region
    $region2: #{classifier_forward.1} parent=1 // pred_check
      _
    $region3: #{classifier_forward.1} parent=1 // pred_check_branch
      %13 = sbr.rel (0) target = $region5
    $region4: #{classifier_forward.1} parent=1 // pred_region
      %s15 = ssub.s32 512, 512
      %16 = vsyncadd [#allocation3], %s15
      %s17 = sshll.u32 [#allocation2], 4
      %s18 = int_to_ptr.vmem [resolvable:$true] %s17
      %23 = dma.hbm_to_vmem [thread:$0]  %s0, 512, %s18, [#allocation3], 256, 256, 16
    $region5: #{classifier_forward.1} parent=1 // pred_fallthru
      _
    // Predicated region
    $region6: #{classifier_forward.1} parent=1 // pred_check
      _
    $region7: #{classifier_forward.1} parent=1 // pred_check_branch
      %25 = sbr.rel (0) target = $region9
    $region8: #{classifier_forward.1} parent=1 // pred_region
      %s27 = ssub.s32 2048, 2048
      %28 = vsyncadd [#allocation5], %s27
      %s29 = sshll.u32 [#allocation4], 4
      %s30 = int_to_ptr.vmem [resolvable:$true] %s29
      %35 = dma.hbm_to_vmem [thread:$0]  %s1, 2048, %s30, [#allocation5], 64, 64, 4
    $region9: #{classifier_forward.1} parent=1 // pred_fallthru
      _
    // Predicated region
    $region10: #{classifier_forward.1} parent=1 // pred_check
      _
    $region11: #{classifier_forward.1} parent=1 // pred_check_branch
      %37 = sbr.rel (0) target = $region13
    $region12: #{classifier_forward.1} parent=1 // pred_region
      _
    $region13: #{classifier_forward.1} parent=1 // pred_fallthru
      _
    // Predicated region
    $region14: #{classifier_forward.1} parent=1 // pred_check
      _
    $region15: #{classifier_forward.1} parent=1 // pred_check_branch
      %39 = sbr.rel (0) target = $region17
    $region16: #{classifier_forward.1} parent=1 // pred_region
      %s41 = ssub.s32 1024, 1024
      %42 = vsyncadd [#allocation5], %s41
      %s43 = sshll.u32 [#allocation6], 4
      %s44 = int_to_ptr.vmem [resolvable:$true] %s43
      %49 = dma.hbm_to_vmem [thread:$0]  %s3, 1024, %s44, [#allocation5], 64, 64, 4
    $region17: #{classifier_forward.1} parent=1 // pred_fallthru
      _
    // Predicated region
    $region18: #{classifier_forward.1} parent=1 // pred_check
      _
    $region19: #{classifier_forward.1} parent=1 // pred_check_branch
      %51 = sbr.rel (0) target = $region21
    $region20: #{classifier_forward.1} parent=1 // pred_region
      _
    $region21: #{classifier_forward.1} parent=1 // pred_fallthru
      _
    // Predicated region
    $region22: #{classifier_forward.1} parent=1 // pred_check
      _
    $region23: #{classifier_forward.1} parent=1 // pred_check_branch
      %53 = sbr.rel (0) target = $region25
    $region24: #{classifier_forward.1} parent=1 // pred_region
      %54 = dma.done [#allocation3], 512
    $region25: #{classifier_forward.1} parent=1 // pred_fallthru
      _
    // Predicated region
    $region26: #{classifier_forward.1} parent=1 // pred_check
      _
    $region27: #{classifier_forward.1} parent=1 // pred_check_branch
      %56 = sbr.rel (0) target = $region29
    $region28: #{classifier_forward.1} parent=1 // pred_region
      %57 = dma.done [#allocation5], 2048
    $region29: #{classifier_forward.1} parent=1 // pred_fallthru
      _
    // Predicated region
    $region30: #{classifier_forward.1} parent=1 // pred_check
      _
    $region31: #{classifier_forward.1} parent=1 // pred_check_branch
      %59 = sbr.rel (0) target = $region33
    $region32: #{classifier_forward.1} parent=1 // pred_region
      %60 = dma.done [#allocation5], 1024
    $region33: #{classifier_forward.1} parent=1 // pred_fallthru
      _
    %v62 = vld [vmem:[#allocation2] sm:$0xff]
    %v63 = vld [vmem:[#allocation2 + $0x8] sm:$0xff]
    %v64 = vld [vmem:[#allocation2 + $0x10] sm:$0xff]
    %v65 = vld [vmem:[#allocation2 + $0x18] sm:$0xff]
    %v66 = vpack.c.bf16 %v64, %v62
    %v67 = vpack.c.bf16 %v65, %v63
    %v68 = vld [vmem:[#allocation4] sm:$0xf]
    %v69 = vld [vmem:[#allocation4 + $0x4] sm:$0xf]
    %v70 = vld [vmem:[#allocation4 + $0x8] sm:$0xf]
    %v71 = vld [vmem:[#allocation4 + $0xc] sm:$0xf]
    %v72 = vld [vmem:[#allocation4 + $0x10] sm:$0xf]
    %v73 = vld [vmem:[#allocation4 + $0x14] sm:$0xf]
    %v74 = vld [vmem:[#allocation4 + $0x18] sm:$0xf]
    %v75 = vld [vmem:[#allocation4 + $0x1c] sm:$0xf]
    %v76 = vld [vmem:[#allocation4 + $0x20] sm:$0xf]
    %v77 = vld [vmem:[#allocation4 + $0x24] sm:$0xf]
    %v78 = vld [vmem:[#allocation4 + $0x28] sm:$0xf]
    %v79 = vld [vmem:[#allocation4 + $0x2c] sm:$0xf]
    %v80 = vld [vmem:[#allocation4 + $0x30] sm:$0xf]
    %v81 = vld [vmem:[#allocation4 + $0x34] sm:$0xf]
    %v82 = vld [vmem:[#allocation4 + $0x38] sm:$0xf]
    %v83 = vld [vmem:[#allocation4 + $0x3c] sm:$0xf]
    %v84 = vld [vmem:[#allocation4 + $0x40] sm:$0xf]
    %v85 = vld [vmem:[#allocation4 + $0x44] sm:$0xf]
    %v86 = vld [vmem:[#allocation4 + $0x48] sm:$0xf]
    %v87 = vld [vmem:[#allocation4 + $0x4c] sm:$0xf]
    %v88 = vld [vmem:[#allocation4 + $0x50] sm:$0xf]
    %v89 = vld [vmem:[#allocation4 + $0x54] sm:$0xf]
    %v90 = vld [vmem:[#allocation4 + $0x58] sm:$0xf]
    %v91 = vld [vmem:[#allocation4 + $0x5c] sm:$0xf]
    %v92 = vld [vmem:[#allocation4 + $0x60] sm:$0xf]
    %v93 = vld [vmem:[#allocation4 + $0x64] sm:$0xf]
    %v94 = vld [vmem:[#allocation4 + $0x68] sm:$0xf]
    %v95 = vld [vmem:[#allocation4 + $0x6c] sm:$0xf]
    %v96 = vld [vmem:[#allocation4 + $0x70] sm:$0xf]
    %v97 = vld [vmem:[#allocation4 + $0x74] sm:$0xf]
    %v98 = vld [vmem:[#allocation4 + $0x78] sm:$0xf]
    %v99 = vld [vmem:[#allocation4 + $0x7c] sm:$0xf]
    %v100 = vld [vmem:[%s2] sm:$0x1]
    %v102 = vlaneseq
    %v103 = vshrl.u32 %v102, 7
    %v104 = vsub.s32 0, %v103
    %v105 = vrot.slane %v100, %v104
    %v139 = vunpack.c.l.b16 %v68
    %v140 = vunpack.c.l.b16 %v69
    %v141 = vunpack.c.l.b16 %v70
    %v142 = vunpack.c.l.b16 %v71
    %v143 = vunpack.c.l.b16 %v72
    %v144 = vunpack.c.l.b16 %v73
    %v145 = vunpack.c.l.b16 %v74
    %v146 = vunpack.c.l.b16 %v75
    %v147 = vunpack.c.l.b16 %v76
    %v148 = vunpack.c.l.b16 %v77
    %v149 = vunpack.c.l.b16 %v78
    %v150 = vunpack.c.l.b16 %v79
    %v151 = vunpack.c.l.b16 %v80
    %v152 = vunpack.c.l.b16 %v81
    %v153 = vunpack.c.l.b16 %v82
    %v154 = vunpack.c.l.b16 %v83
    %v155 = vunpack.c.l.b16 %v84
    %v156 = vunpack.c.l.b16 %v85
    %v157 = vunpack.c.l.b16 %v86
    %v158 = vunpack.c.l.b16 %v87
    %v159 = vunpack.c.l.b16 %v88
    %v160 = vunpack.c.l.b16 %v89
    %v161 = vunpack.c.l.b16 %v90
    %v162 = vunpack.c.l.b16 %v91
    %v163 = vunpack.c.l.b16 %v92
    %v164 = vunpack.c.l.b16 %v93
    %v165 = vunpack.c.l.b16 %v94
    %v166 = vunpack.c.l.b16 %v95
    %v167 = vunpack.c.l.b16 %v96
    %v168 = vunpack.c.l.b16 %v97
    %v169 = vunpack.c.l.b16 %v98
    %v170 = vunpack.c.l.b16 %v99
    %v171 = vpack.c.b16 %v140, %v139
    %v172 = vpack.c.b16 %v142, %v141
    %v173 = vpack.c.b16 %v144, %v143
    %v174 = vpack.c.b16 %v146, %v145
    %v175 = vpack.c.b16 %v148, %v147
    %v176 = vpack.c.b16 %v150, %v149
    %v177 = vpack.c.b16 %v152, %v151
    %v178 = vpack.c.b16 %v154, %v153
    %v179 = vpack.c.b16 %v156, %v155
    %v180 = vpack.c.b16 %v158, %v157
    %v181 = vpack.c.b16 %v160, %v159
    %v182 = vpack.c.b16 %v162, %v161
    %v183 = vpack.c.b16 %v164, %v163
    %v184 = vpack.c.b16 %v166, %v165
    %v185 = vpack.c.b16 %v168, %v167
    %v186 = vpack.c.b16 %v170, %v169
    %203 = vmatprep.subr.bf16.mxu0 0
    %204 = vmatpush1.bf16.msra.mxu0 %v171
    %205 = vmatprep.subr.bf16.mxu0 0
    %206 = vmatpush1.bf16.msra.mxu0 %v172
    %207 = vmatprep.subr.bf16.mxu0 0
    %208 = vmatpush1.bf16.msra.mxu0 %v173
    %209 = vmatprep.subr.bf16.mxu0 0
    %210 = vmatpush1.bf16.msra.mxu0 %v174
    %211 = vmatprep.subr.bf16.mxu0 0
    %212 = vmatpush1.bf16.msra.mxu0 %v175
    %213 = vmatprep.subr.bf16.mxu0 0
    %214 = vmatpush1.bf16.msra.mxu0 %v176
    %215 = vmatprep.subr.bf16.mxu0 0
    %216 = vmatpush1.bf16.msra.mxu0 %v177
    %217 = vmatprep.subr.bf16.mxu0 0
    %218 = vmatpush1.bf16.msra.mxu0 %v178
    %219 = vmatprep.subr.bf16.mxu0 0
    %220 = vmatpush1.bf16.msra.mxu0 %v179
    %221 = vmatprep.subr.bf16.mxu0 0
    %222 = vmatpush1.bf16.msra.mxu0 %v180
    %223 = vmatprep.subr.bf16.mxu0 0
    %224 = vmatpush1.bf16.msra.mxu0 %v181
    %225 = vmatprep.subr.bf16.mxu0 0
    %226 = vmatpush1.bf16.msra.mxu0 %v182
    %227 = vmatprep.subr.bf16.mxu0 0
    %228 = vmatpush1.bf16.msra.mxu0 %v183
    %229 = vmatprep.subr.bf16.mxu0 0
    %230 = vmatpush1.bf16.msra.mxu0 %v184
    %231 = vmatprep.subr.bf16.mxu0 0
    %232 = vmatpush1.bf16.msra.mxu0 %v185
    %233 = vmatprep.subr.bf16.mxu0 0
    %234 = vmatpush1.bf16.msra.mxu0 %v186
    %235 = vmatprep.mubr.bf16.mxu0 %v67
    %236 = vmatmul.mubr.bf16.gmra.mrb[0].mxu0 %v66
    %v237 = vpop.f32.mrb[0].mxu0
    %v238 = vadd.f32 %v105, %v237
    %v239 = vpop.f32.mrb[0].mxu0
    %v240 = vpop.f32.mrb[0].mxu0
    %v241 = vadd.f32 %v105, %v240
    %v242 = vpop.f32.mrb[0].mxu0
    %243 = vdwg.mxu0
    %v244 = vmul.f32 %v238, 0.5
    %v245 = vmul.f32 %v241, 0.5
    %v246 = vmul.f32 %v238, 0.70710677
    %v247 = vmul.f32 %v241, 0.70710677
    %v248 = verf.f32.pop %v246
    %v249 = verf.f32.pop %v247
    %v250 = vadd.f32 %v248, 1.0
    %v251 = vadd.f32 %v249, 1.0
    %v252 = vmul.f32 %v244, %v250
    %v253 = vmul.f32 %v245, %v251
    %v254 = vpack.c.bf16 %v253, %v252
    %v255 = vld [vmem:[#allocation6] sm:$0xf]
    %v256 = vld [vmem:[#allocation6 + $0x4] sm:$0xf]
    %v257 = vld [vmem:[#allocation6 + $0x8] sm:$0xf]
    %v258 = vld [vmem:[#allocation6 + $0xc] sm:$0xf]
    %v259 = vld [vmem:[#allocation6 + $0x10] sm:$0xf]
    %v260 = vld [vmem:[#allocation6 + $0x14] sm:$0xf]
    %v261 = vld [vmem:[#allocation6 + $0x18] sm:$0xf]
    %v262 = vld [vmem:[#allocation6 + $0x1c] sm:$0xf]
    %v263 = vld [vmem:[#allocation6 + $0x20] sm:$0xf]
    %v264 = vld [vmem:[#allocation6 + $0x24] sm:$0xf]
    %v265 = vld [vmem:[#allocation6 + $0x28] sm:$0xf]
    %v266 = vld [vmem:[#allocation6 + $0x2c] sm:$0xf]
    %v267 = vld [vmem:[#allocation6 + $0x30] sm:$0xf]
    %v268 = vld [vmem:[#allocation6 + $0x34] sm:$0xf]
    %v269 = vld [vmem:[#allocation6 + $0x38] sm:$0xf]
    %v270 = vld [vmem:[#allocation6 + $0x3c] sm:$0xf]
    %v271 = vld [vmem:[%s4] sm:$0x1]
    %v273 = vlaneseq
    %v274 = vshrl.u32 %v273, 7
    %v275 = vsub.s32 0, %v274
    %v276 = vrot.slane %v271, %v275
    %v294 = vunpack.c.l.b16 %v255
    %v295 = vunpack.c.l.b16 %v256
    %v296 = vunpack.c.l.b16 %v257
    %v297 = vunpack.c.l.b16 %v258
    %v298 = vunpack.c.l.b16 %v259
    %v299 = vunpack.c.l.b16 %v260
    %v300 = vunpack.c.l.b16 %v261
    %v301 = vunpack.c.l.b16 %v262
    %v302 = vunpack.c.l.b16 %v263
    %v303 = vunpack.c.l.b16 %v264
    %v304 = vunpack.c.l.b16 %v265
    %v305 = vunpack.c.l.b16 %v266
    %v306 = vunpack.c.l.b16 %v267
    %v307 = vunpack.c.l.b16 %v268
    %v308 = vunpack.c.l.b16 %v269
    %v309 = vunpack.c.l.b16 %v270
    %v310 = vpack.c.b16 %v295, %v294
    %v311 = vpack.c.b16 %v297, %v296
    %v312 = vpack.c.b16 %v299, %v298
    %v313 = vpack.c.b16 %v301, %v300
    %v314 = vpack.c.b16 %v303, %v302
    %v315 = vpack.c.b16 %v305, %v304
    %v316 = vpack.c.b16 %v307, %v306
    %v317 = vpack.c.b16 %v309, %v308
    %326 = vmatprep.subr.bf16.mxu0 0
    %327 = vmatpush1.bf16.msra.mxu0 %v310
    %328 = vmatprep.subr.bf16.mxu0 0
    %329 = vmatpush1.bf16.msra.mxu0 %v311
    %330 = vmatprep.subr.bf16.mxu0 0
    %331 = vmatpush1.bf16.msra.mxu0 %v312
    %332 = vmatprep.subr.bf16.mxu0 0
    %333 = vmatpush1.bf16.msra.mxu0 %v313
    %334 = vmatprep.subr.bf16.mxu0 0
    %335 = vmatpush1.bf16.msra.mxu0 %v314
    %336 = vmatprep.subr.bf16.mxu0 0
    %337 = vmatpush1.bf16.msra.mxu0 %v315
    %338 = vmatprep.subr.bf16.mxu0 0
    %339 = vmatpush1.bf16.msra.mxu0 %v316
    %340 = vmatprep.subr.bf16.mxu0 0
    %341 = vmatpush1.bf16.msra.mxu0 %v317
    %342 = vmatprep.subr.bf16.mxu0 0
    %343 = vmatpush1.bf16.msra.mxu0 0
    %344 = vmatprep.subr.bf16.mxu0 0
    %345 = vmatpush1.bf16.msra.mxu0 0
    %346 = vmatprep.subr.bf16.mxu0 0
    %347 = vmatpush1.bf16.msra.mxu0 0
    %348 = vmatprep.subr.bf16.mxu0 0
    %349 = vmatpush1.bf16.msra.mxu0 0
    %350 = vmatprep.subr.bf16.mxu0 0
    %351 = vmatpush1.bf16.msra.mxu0 0
    %352 = vmatprep.subr.bf16.mxu0 0
    %353 = vmatpush1.bf16.msra.mxu0 0
    %354 = vmatprep.subr.bf16.mxu0 0
    %355 = vmatpush1.bf16.msra.mxu0 0
    %356 = vmatprep.subr.bf16.mxu0 0
    %357 = vmatpush1.bf16.msra.mxu0 0
    %358 = vmatprep.mubr.bf16.mxu0 0
    %359 = vmatmul.mubr.bf16.gmra.mrb[0].mxu0 %v254
    %v360 = vpop.f32.mrb[0].mxu0
    %v361 = vadd.f32 %v276, %v360
    %v362 = vpop.f32.mrb[0].mxu0
    %v363 = vpop.f32.mrb[0].mxu0
    %v364 = vadd.f32 %v276, %v363
    %v365 = vpop.f32.mrb[0].mxu0
    %366 = vdwg.mxu0
    %367 = vst [vmem:[%s5] sm:$0xff] %v361
    %368 = vst [vmem:[%s5 + $0x8] sm:$0xff] %v364
    // Predicated region
    $region34: #{classifier_forward.1} parent=1 // pred_check
      _
    $region35: #{classifier_forward.1} parent=1 // pred_check_branch
      %370 = sbr.rel (0) target = $region37
    $region36: #{classifier_forward.1} parent=1 // pred_region
      _
    $region37: #{classifier_forward.1} parent=1 // pred_fallthru
      _
    // Predicated region
    $region38: #{classifier_forward.1} parent=1 // pred_check
      _
    $region39: #{classifier_forward.1} parent=1 // pred_check_branch
      %372 = sbr.rel (0) target = $region41
    $region40: #{classifier_forward.1} parent=1 // pred_region
      _
    $region41: #{classifier_forward.1} parent=1 // pred_fallthru
      _
    %373 = vsyncpa [#allocation3], 1
    %374 = vsyncpa [#allocation5], 1

</llo_original>
